<compile_context>
chip_gen: v7x
topology: tpu7x:2x2x1
jax: 0.10.0
libtpu: 0.0.40
codegen_flags: <defaults>
</compile_context>

<pallas_src>
import jax
import jax.numpy as jnp
from jax.experimental import pallas as pl
from jax.experimental.pallas import tpu as pltpu

_LANES = 128
_TARGET_BLOCK_BYTES = 2 * 1024 * 1024  # ~2 MiB tiles sit at/above the roofline knee


# ---------------------------------------------------------------------------
# Pallas kernel
# ---------------------------------------------------------------------------

def _identity_copy_kernel(x_ref, o_ref):
    # (tm, 128) VMEM tile -> straight, lane-dense copy (unmasked vst).
    o_ref[...] = x_ref[...]


# ---------------------------------------------------------------------------
# Wrapper
# ---------------------------------------------------------------------------

def pallas_identity(x, *, zero_copy=False):
    """y = x.

    zero_copy=True returns the input untouched (optimal: Identity needs no
    HBM traffic at all).  The default runs one tiled Pallas copy pass so a
    real kernel is exercised: HBM read + HBM write, nothing else.
    """
    if zero_copy or x.size == 0:
        return x

    orig_shape = x.shape
    n = x.size
    dt = jnp.dtype(x.dtype)
    itemsize = dt.itemsize

    # dtype-aware minimum sublane multiple: 8 (4-byte), 16 (2-byte), 32 (1-byte).
    sub = max(8, 32 // itemsize)

    flat = x.reshape(-1)                      # metadata-only for contiguous x
    rem = n % _LANES
    if rem:
        # Pad only the <128-element tail (never taken for the aligned demo input).
        flat = jnp.pad(flat, (0, _LANES - rem))
    rows = flat.shape[0] // _LANES
    x2d = flat.reshape(rows, _LANES)          # lane-dense (rows, 128) slab

    # Block rows: whole array if it is small, otherwise ~_TARGET_BLOCK_BYTES
    # per tile rounded to the dtype's sublane multiple.  A partial final block
    # (rows % tm != 0) is masked by Pallas automatically.
    tm_target = max(sub, _TARGET_BLOCK_BYTES // (_LANES * itemsize))
    if rows <= tm_target:
        tm = rows                              # single full block (always legal)
    else:
        tm = max(sub, (tm_target // sub) * sub)

    grid = (pl.cdiv(rows, tm),)

    out = pl.pallas_call(
        _identity_copy_kernel,
        out_shape=jax.ShapeDtypeStruct((rows, _LANES), x2d.dtype),
        grid=grid,
        in_specs=[pl.BlockSpec((tm, _LANES), lambda i: (i, 0))],
        out_specs=pl.BlockSpec((tm, _LANES), lambda i: (i, 0)),
        compiler_params=pltpu.CompilerParams(
            dimension_semantics=("parallel",)),
        cost_estimate=pl.CostEstimate(
            flops=0, transcendentals=0, bytes_accessed=2 * n * itemsize),
    )(x2d)

    out = out.reshape(-1)
    if rem:
        out = out[:n]                          # only when a tail was padded
    return out.reshape(orig_shape)


# ---------------------------------------------------------------------------
# Main
# ---------------------------------------------------------------------------

if __name__ == "__main__":
    key = jax.random.PRNGKey(0)

    # Small shape consistent with the module (Identity accepts any tensor).
    N, C, H, W = 2, 4, 16, 16
    x = jax.random.normal(key, (N, C, H, W), jnp.float32)

    y = pallas_identity(x)
    y = jax.block_until_ready(y)

    assert y.shape == x.shape, (y.shape, x.shape)
    assert y.dtype == x.dtype, (y.dtype, x.dtype)
    # Identity is a pure copy -> must be bit-exact.
    assert bool(jnp.array_equal(y, x))

    print("KERNEL_OK")
</pallas_src>

<mosaic_0001>
module attributes {stable_mosaic.version = 11 : i64} {
  func.func @_identity_copy_kernel(%arg0: i32, %arg1: memref<16x128xf32, #tpu.memory_space<vmem>>, %arg2: memref<16x128xf32, #tpu.memory_space<vmem>>) attributes {dimension_semantics = [#tpu.dimension_semantics<parallel>], iteration_bounds = array<i64: 1>, scalar_prefetch = 0 : i64, scratch_operands = 0 : i64, tpu.core_type = #tpu.core_type<tc>, window_params = [{transform_indices = @transform_0, window_bounds = array<i64: 16, 128>}, {transform_indices = @transform_1, window_bounds = array<i64: 16, 128>}]} {
    %c0 = arith.constant 0 : index
    %c0_0 = arith.constant 0 : index
    %0 = vector.load %arg1[%c0, %c0_0] : memref<16x128xf32, #tpu.memory_space<vmem>>, vector<16x128xf32>
    %c0_1 = arith.constant 0 : index
    %c0_2 = arith.constant 0 : index
    %1 = vector.load %arg2[%c0_1, %c0_2] : memref<16x128xf32, #tpu.memory_space<vmem>>, vector<16x128xf32>
    tpu.vector_store %arg2[%c0_1, %c0_2], %0 {strides = array<i32>} : memref<16x128xf32, #tpu.memory_space<vmem>>, vector<16x128xf32>,
    return
  }
  func.func @transform_0(%arg0: i32) -> (i32, i32) {
    %c0_i32 = arith.constant 0 : i32
    %c0_i32_0 = arith.constant 0 : i32
    return %arg0, %c0_i32 : i32, i32
  }
  func.func @transform_1(%arg0: i32) -> (i32, i32) {
    %c0_i32 = arith.constant 0 : i32
    %c0_i32_0 = arith.constant 0 : i32
    return %arg0, %c0_i32 : i32, i32
  }
}

</mosaic_0001>

<llo_original>
// kernel: tpu_custom_call.1
$region0: #{tpu_custom_call.1}
  #allocation0 [shape = 'u32[]', space=smem, size = 0x4, offset = 0x4, fixed_abs, tag = 'smem constant byte address 0x4 - core index']
  #allocation1 [shape = 'u32[144,128]{1,0:T(1,128)}', space=vmem, size = 0x12000, scoped, tag = 'internal scratch']
  %s0 = inlined_call_operand.hbm [shape: f32[16,128], index: 0, kind: input, shape index: {}]
  %s1 = inlined_call_operand.hbm [shape: f32[16,128], index: 1, kind: output, shape index: {}]
  %s2 = sld [smem:[#allocation0]]
  $region18: #{tpu_custom_call.1} parent=0
    _
  %s4 = ssub.s32 1, %s2
  %s5 = scalar_select 0, %s4, %s2
  $region1: #{tpu_custom_call.1} parent=0
    #allocation2 [shape = 'u8[8192]{0}', space=vmem, size = 0x2000, scoped, tag = 'input window, operand 0, single buffered']
    #allocation3 [shape = 's32[1]{0}', space=sflag, size = 0x4, scoped, tag = 'scoped memory for tpu_custom_call.1']
    #allocation4 [shape = 's32[1]{0}', space=sflag, size = 0x4, scoped, tag = 'scoped memory for tpu_custom_call.1']
    #allocation5 [shape = 'u8[8192]{0}', space=vmem, size = 0x2000, scoped, tag = 'output window, operand 0, single buffered']
    %6 = vsyncpa [#allocation3], 0
    %7 = vsyncpa [#allocation4], 0
    // Predicated region
    $region2: #{tpu_custom_call.1} parent=1 // pred_check
      _
    $region3: #{tpu_custom_call.1} parent=1 // pred_check_branch
      %9 = sbr.rel (0) target = $region5
    $region4: #{tpu_custom_call.1} parent=1 // pred_region
      %s11 = ssub.s32 256, 256
      %12 = vsyncadd [#allocation3], %s11
      %s13 = sshll.u32 [#allocation2], 4
      %s14 = int_to_ptr.vmem [resolvable:$true] %s13
      %19 = dma.hbm_to_vmem [thread:$0]  %s0, 256, %s14, [#allocation3], 128, 128, 8
    $region5: #{tpu_custom_call.1} parent=1 // pred_fallthru
      _
    // Predicated region
    $region6: #{tpu_custom_call.1} parent=1 // pred_check
      _
    $region7: #{tpu_custom_call.1} parent=1 // pred_check_branch
      %21 = sbr.rel (0) target = $region9
    $region8: #{tpu_custom_call.1} parent=1 // pred_region
      %22 = dma.done [#allocation3], 256
    $region9: #{tpu_custom_call.1} parent=1 // pred_fallthru
      _
    %v23 = vld [vmem:[#allocation2] sm:$0xff]
    %v24 = vld [vmem:[#allocation2 + $0x8] sm:$0xff]
    %25 = vst [vmem:[#allocation5] sm:$0xff] %v23
    %26 = vst [vmem:[#allocation5 + $0x8] sm:$0xff] %v24
    // Predicated region
    $region10: #{tpu_custom_call.1} parent=1 // pred_check
      _
    $region11: #{tpu_custom_call.1} parent=1 // pred_check_branch
      %28 = sbr.rel (0) target = $region13
    $region12: #{tpu_custom_call.1} parent=1 // pred_region
      %s30 = ssub.s32 256, 256
      %31 = vsyncadd [#allocation4], %s30
      %s32 = sshll.u32 [#allocation5], 4
      %s33 = int_to_ptr.vmem [resolvable:$true] %s32
      %38 = dma.vmem_to_hbm [thread:$0]  %s33, 256, %s1, [#allocation4], 128, 128, 8
    $region13: #{tpu_custom_call.1} parent=1 // pred_fallthru
      _
    // Predicated region
    $region14: #{tpu_custom_call.1} parent=1 // pred_check
      _
    $region15: #{tpu_custom_call.1} parent=1 // pred_check_branch
      %40 = sbr.rel (0) target = $region17
    $region16: #{tpu_custom_call.1} parent=1 // pred_region
      %41 = dma.done [#allocation4], 256
    $region17: #{tpu_custom_call.1} parent=1 // pred_fallthru
      _
    %42 = vsyncpa [#allocation3], 1
    %43 = vsyncpa [#allocation4], 1

</llo_original>
